<compile_context>
chip_gen: v7x
topology: tpu7x:2x2x1
jax: 0.10.0
libtpu: 0.0.40
codegen_flags: <defaults>
</compile_context>

<pallas_src>
import functools

import jax
import jax.numpy as jnp
from jax.experimental import pallas as pl
from jax.experimental.pallas import tpu as pltpu

EPS = 1e-5  # PyTorch nn.LayerNorm default

_TINY_BYTES = 2 * 1024 * 1024          # below this: single block, no grid
_TARGET_BLOCK_BYTES = 2 * 1024 * 1024  # per-block data target (1-4 MiB band)


def _seasonal_layernorm_kernel(x_ref, g_ref, o_ref, *, inv_embed, inv_seq):
    # x_ref / o_ref: (Bt, S, E) block;  g_ref: (1, 1, E) f32 gamma.
    x = x_ref[...].astype(jnp.float32)                            # (Bt, S, E)

    # ---- LayerNorm statistics via two independent moments ----
    # Both lane reductions depend only on x -> can overlap on the XLU.
    s1 = jnp.sum(x, axis=-1, keepdims=True)                       # (Bt, S, 1)
    s2 = jnp.sum(x * x, axis=-1, keepdims=True)                   # (Bt, S, 1)
    mean = s1 * inv_embed
    var = jnp.maximum(s2 * inv_embed - mean * mean, 0.0)
    y = (x - mean) * jax.lax.rsqrt(var + EPS)                     # rsqrt -> EUP

    # ---- seasonal correction + gamma (beta cancels exactly) ----
    # x_hat - mean_seq(x_hat) = gamma * (y - mean_seq(y))
    seq_bias = jnp.sum(y, axis=1, keepdims=True) * inv_seq        # (Bt, 1, E)
    o_ref[...] = ((y - seq_bias) * g_ref[...]).astype(o_ref.dtype)


def _physical_vmem_bytes():
    try:
        return pltpu.get_tpu_info().vmem_capacity_bytes
    except Exception:
        return 64 * 1024 * 1024  # conservative (v7x)


def _choose_batch_tile(B, S, E, itemsize):
    """Batch tile Bt (divisor of B): ~2 MiB blocks, as many grid steps as B allows
    (>= 8 preferred so both v7x TensorCores get >= 4 pipelined steps each)."""
    total = B * S * E * itemsize
    if total <= _TINY_BYTES:
        return B                              # toy shapes: single block
    row_bytes = S * E * itemsize
    max_rows = max(1, _TARGET_BLOCK_BYTES // row_bytes)
    min_steps = min(8, B)
    divisors = [d for d in range(1, B + 1) if B % d == 0]
    cand = [d for d in divisors if d <= max_rows and (B // d) >= min_steps]
    if cand:
        return max(cand)
    cand = [d for d in divisors if d <= max_rows]
    if cand:
        return max(cand)
    return 1  # TODO(synk): two-pass S-tiling when even one row exceeds budget


def _make_data_spec(bt, S, E, buffer_count):
    idx = lambda i: (i, 0, 0)
    if buffer_count > 2:
        try:
            return pl.BlockSpec((bt, S, E), idx,
                                pipeline_mode=pl.Buffered(buffer_count))
        except Exception:
            pass
    return pl.BlockSpec((bt, S, E), idx)


def seasonal_layernorm(x, gamma, beta=None, *, block_batch=None):
    """LayerNorm(x) - mean_over_seq(LayerNorm(x)).

    Args:
      x:     (B, S, E) input.
      gamma: (E,) LayerNorm weight.
      beta:  (E,) LayerNorm bias.  Accepted for API parity but unused: it
             cancels exactly in the seasonal output.
      block_batch: optional batch-tile override (must divide B).
    Returns:
      (B, S, E) array, same dtype as x.
    """
    del beta  # cancels: x_hat - mean_seq(x_hat) is beta-independent
    B, S, E = x.shape
    itemsize = x.dtype.itemsize
    # Pre-cast gamma to f32 in the wrapper -> no casts in the kernel.
    g3 = gamma.astype(jnp.float32).reshape(1, 1, E)

    kernel = functools.partial(
        _seasonal_layernorm_kernel, inv_embed=1.0 / E, inv_seq=1.0 / S)

    if block_batch is None:
        bt = _choose_batch_tile(B, S, E, itemsize)
    else:
        if B % block_batch != 0:
            raise ValueError("block_batch must divide the batch dimension")
        bt = block_batch

    total_bytes = B * S * E * itemsize
    physical_vmem = _physical_vmem_bytes()
    vmem_limit = min(physical_vmem // 2, 32 * 1024 * 1024)

    out_shape = jax.ShapeDtypeStruct((B, S, E), x.dtype)
    # Mem-bound elementwise kernel: 2 full passes over x (+ gamma), ~9 flops/elem,
    # one rsqrt per (batch, seq) row.
    cost = pl.CostEstimate(
        flops=9 * B * S * E,
        transcendentals=B * S,
        bytes_accessed=2 * B * S * E * itemsize + E * 4)

    if bt == B and total_bytes <= _TINY_BYTES:
        # Tiny-input fast path only: single invocation, no grid.
        param_spec = pl.BlockSpec((1, 1, E), lambda *_: (0, 0, 0))
        return pl.pallas_call(
            kernel,
            out_shape=out_shape,
            in_specs=[pl.BlockSpec((B, S, E), lambda *_: (0, 0, 0)), param_spec],
            out_specs=pl.BlockSpec((B, S, E), lambda *_: (0, 0, 0)),
            compiler_params=pltpu.CompilerParams(vmem_limit_bytes=vmem_limit),
            cost_estimate=cost,
        )(x, g3)

    # Gridded path: (Bt, S, E) blocks, batch-tile axis is "parallel" (megacore
    # shards it on v7x).  The seq-mean reduction is per batch row, so fusing
    # batch rows into a block is exact.
    n_steps = B // bt
    block_bytes = bt * S * E * itemsize
    # 3-deep buffering of the small data blocks on big-VMEM chips (v5e/v6e)
    # hides DMA latency jitter; keep depth 2 on v7x (64 MiB VMEM).
    buffer_count = 3 if (physical_vmem >= 100 * 1024 * 1024
                         and n_steps >= 4
                         and block_bytes <= 4 * 1024 * 1024) else 2
    data_spec = _make_data_spec(bt, S, E, buffer_count)
    param_spec = pl.BlockSpec((1, 1, E), lambda i: (0, 0, 0))
    return pl.pallas_call(
        kernel,
        out_shape=out_shape,
        grid_spec=pltpu.PrefetchScalarGridSpec(
            num_scalar_prefetch=0,
            grid=(n_steps,),
            in_specs=[data_spec, param_spec],
            out_specs=data_spec,
        ),
        compiler_params=pltpu.CompilerParams(
            dimension_semantics=("parallel",),
            vmem_limit_bytes=vmem_limit),
        cost_estimate=cost,
    )(x, g3)


def _reference(x, gamma, beta):
    xf = x.astype(jnp.float32)
    mean = jnp.mean(xf, axis=-1, keepdims=True)
    var = jnp.mean((xf - mean) ** 2, axis=-1, keepdims=True)
    x_hat = (xf - mean) / jnp.sqrt(var + EPS) * gamma + beta
    bias = jnp.mean(x_hat, axis=1, keepdims=True)
    return (x_hat - bias).astype(x.dtype)


if __name__ == "__main__":
    key = jax.random.PRNGKey(0)
    kx, kg, kb, kx2, kx3 = jax.random.split(key, 5)

    # (batch_size, seq_length, embed_dim) — matches the PyTorch module input.
    B, S, E = 2, 8, 32
    x = jax.random.normal(kx, (B, S, E), dtype=jnp.float32)
    gamma = 1.0 + 0.1 * jax.random.normal(kg, (E,), dtype=jnp.float32)
    beta = 0.1 * jax.random.normal(kb, (E,), dtype=jnp.float32)

    out = jax.block_until_ready(seasonal_layernorm(x, gamma, beta))
    ref = _reference(x, gamma, beta)
    assert out.shape == (B, S, E)
    assert jnp.allclose(out, ref, atol=3e-5, rtol=1e-5), "single-block path mismatch"

    # Exercise the gridded (pipelined) path: Bt=2 over B=4 -> 2 grid steps.
    B2 = 4
    x2 = jax.random.normal(kx2, (B2, S, E), dtype=jnp.float32)
    out2 = jax.block_until_ready(seasonal_layernorm(x2, gamma, beta, block_batch=2))
    ref2 = _reference(x2, gamma, beta)
    assert out2.shape == (B2, S, E)
    assert jnp.allclose(out2, ref2, atol=3e-5, rtol=1e-5), "tiled path mismatch"

    # Exercise the >=8-step pipelined path (Bt=1 over B=8).
    B3 = 8
    x3 = jax.random.normal(kx3, (B3, S, E), dtype=jnp.float32)
    out3 = jax.block_until_ready(seasonal_layernorm(x3, gamma, beta, block_batch=1))
    ref3 = _reference(x3, gamma, beta)
    assert out3.shape == (B3, S, E)
    assert jnp.allclose(out3, ref3, atol=3e-5, rtol=1e-5), "8-step path mismatch"

    print("KERNEL_OK")
</pallas_src>

<mosaic_0001>
module attributes {stable_mosaic.version = 11 : i64} {
  func.func @_seasonal_layernorm_kernel(%arg0: memref<2x8x32xf32, #tpu.memory_space<vmem>>, %arg1: memref<1x1x32xf32, #tpu.memory_space<vmem>>, %arg2: memref<2x8x32xf32, #tpu.memory_space<vmem>>) attributes {dimension_semantics = [], scalar_prefetch = 0 : i64, scratch_operands = 0 : i64, tpu.core_type = #tpu.core_type<tc>} {
    %c0 = arith.constant 0 : index
    %c0_0 = arith.constant 0 : index
    %c0_1 = arith.constant 0 : index
    %0 = vector.load %arg0[%c0, %c0_0, %c0_1] : memref<2x8x32xf32, #tpu.memory_space<vmem>>, vector<2x8x32xf32>
    %cst = arith.constant dense<0.000000e+00> : vector<2x8xf32>
    %1 = vector.multi_reduction <add>, %0, %cst [2] : vector<2x8x32xf32> to vector<2x8xf32>
    %2 = vector.shape_cast %1 : vector<2x8xf32> to vector<2x8x1xf32>
    %3 = arith.mulf %0, %0 : vector<2x8x32xf32>
    %cst_2 = arith.constant dense<0.000000e+00> : vector<2x8xf32>
    %4 = vector.multi_reduction <add>, %3, %cst_2 [2] : vector<2x8x32xf32> to vector<2x8xf32>
    %5 = vector.shape_cast %4 : vector<2x8xf32> to vector<2x8x1xf32>
    %cst_3 = arith.constant 3.125000e-02 : f32
    %6 = vector.broadcast %cst_3 : f32 to vector<2x8x1xf32>
    %7 = arith.mulf %2, %6 : vector<2x8x1xf32>
    %cst_4 = arith.constant 3.125000e-02 : f32
    %8 = vector.broadcast %cst_4 : f32 to vector<2x8x1xf32>
    %9 = arith.mulf %5, %8 : vector<2x8x1xf32>
    %10 = arith.mulf %7, %7 : vector<2x8x1xf32>
    %11 = arith.subf %9, %10 : vector<2x8x1xf32>
    %cst_5 = arith.constant 0.000000e+00 : f32
    %12 = vector.broadcast %cst_5 : f32 to vector<2x8x1xf32>
    %13 = arith.maximumf %11, %12 : vector<2x8x1xf32>
    %14 = vector.broadcast %7 : vector<2x8x1xf32> to vector<2x8x32xf32>
    %15 = arith.subf %0, %14 : vector<2x8x32xf32>
    %cst_6 = arith.constant 9.99999974E-6 : f32
    %16 = vector.broadcast %cst_6 : f32 to vector<2x8x1xf32>
    %17 = arith.addf %13, %16 : vector<2x8x1xf32>
    %18 = math.rsqrt %17 : vector<2x8x1xf32>
    %19 = vector.broadcast %18 : vector<2x8x1xf32> to vector<2x8x32xf32>
    %20 = arith.mulf %15, %19 : vector<2x8x32xf32>
    %cst_7 = arith.constant dense<0.000000e+00> : vector<2x32xf32>
    %21 = vector.multi_reduction <add>, %20, %cst_7 [1] : vector<2x8x32xf32> to vector<2x32xf32>
    %22 = vector.shape_cast %21 : vector<2x32xf32> to vector<2x1x32xf32>
    %cst_8 = arith.constant 1.250000e-01 : f32
    %23 = vector.broadcast %cst_8 : f32 to vector<2x1x32xf32>
    %24 = arith.mulf %22, %23 : vector<2x1x32xf32>
    %25 = vector.broadcast %24 : vector<2x1x32xf32> to vector<2x8x32xf32>
    %26 = arith.subf %20, %25 : vector<2x8x32xf32>
    %c0_9 = arith.constant 0 : index
    %c0_10 = arith.constant 0 : index
    %c0_11 = arith.constant 0 : index
    %27 = vector.load %arg1[%c0_9, %c0_10, %c0_11] : memref<1x1x32xf32, #tpu.memory_space<vmem>>, vector<1x1x32xf32>
    %28 = vector.broadcast %27 : vector<1x1x32xf32> to vector<2x8x32xf32>
    %29 = arith.mulf %26, %28 : vector<2x8x32xf32>
    %c0_12 = arith.constant 0 : index
    %c0_13 = arith.constant 0 : index
    %c0_14 = arith.constant 0 : index
    %30 = vector.load %arg2[%c0_12, %c0_13, %c0_14] : memref<2x8x32xf32, #tpu.memory_space<vmem>>, vector<2x8x32xf32>
    tpu.vector_store %arg2[%c0_12, %c0_13, %c0_14], %29 {strides = array<i32>} : memref<2x8x32xf32, #tpu.memory_space<vmem>>, vector<2x8x32xf32>,
    return
  }
}

</mosaic_0001>

<llo_original>
// kernel: tpu_custom_call.1
$region0: #{tpu_custom_call.1}
  #allocation0 [shape = 'u32[]', space=smem, size = 0x4, offset = 0x4, fixed_abs, tag = 'smem constant byte address 0x4 - core index']
  #allocation1 [shape = 'u32[144,128]{1,0:T(1,128)}', space=vmem, size = 0x12000, scoped, tag = 'internal scratch']
  %s0 = inlined_call_operand.hbm [shape: f32[2,8,32], index: 0, kind: input, shape index: {}]
  %s1 = inlined_call_operand.vmem [shape: f32[1,1,32], index: 1, kind: input, shape index: {}]
  %s2 = inlined_call_operand.hbm [shape: f32[2,8,32], index: 2, kind: output, shape index: {}]
  %s3 = sld [smem:[#allocation0]]
  $region22: #{tpu_custom_call.1} parent=0
    _
  %s5 = ssub.s32 1, %s3
  %s6 = scalar_select 0, %s5, %s3
  $region1: #{tpu_custom_call.1} parent=0
    #allocation2 [shape = 'u8[8192]{0}', space=vmem, size = 0x2000, scoped, tag = 'input window, operand 0, single buffered']
    #allocation3 [shape = 's32[1]{0}', space=sflag, size = 0x4, scoped, tag = 'scoped memory for tpu_custom_call.1']
    #allocation4 [shape = 's32[1]{0}', space=sflag, size = 0x4, scoped, tag = 'scoped memory for tpu_custom_call.1']
    #allocation5 [shape = 'u8[8192]{0}', space=vmem, size = 0x2000, scoped, tag = 'output window, operand 0, single buffered']
    %7 = vsyncpa [#allocation3], 0
    %8 = vsyncpa [#allocation4], 0
    // Predicated region
    $region2: #{tpu_custom_call.1} parent=1 // pred_check
      _
    $region3: #{tpu_custom_call.1} parent=1 // pred_check_branch
      %10 = sbr.rel (0) target = $region5
    $region4: #{tpu_custom_call.1} parent=1 // pred_region
      %s12 = ssub.s32 256, 256
      %13 = vsyncadd [#allocation3], %s12
      %s14 = sshll.u32 [#allocation2], 4
      %s15 = int_to_ptr.vmem [resolvable:$true] %s14
      %20 = dma.hbm_to_vmem [thread:$0]  %s0, 256, %s15, [#allocation3], 128, 128, 8
    $region5: #{tpu_custom_call.1} parent=1 // pred_fallthru
      _
    // Predicated region
    $region6: #{tpu_custom_call.1} parent=1 // pred_check
      _
    $region7: #{tpu_custom_call.1} parent=1 // pred_check_branch
      %22 = sbr.rel (0) target = $region9
    $region8: #{tpu_custom_call.1} parent=1 // pred_region
      _
    $region9: #{tpu_custom_call.1} parent=1 // pred_fallthru
      _
    // Predicated region
    $region10: #{tpu_custom_call.1} parent=1 // pred_check
      _
    $region11: #{tpu_custom_call.1} parent=1 // pred_check_branch
      %24 = sbr.rel (0) target = $region13
    $region12: #{tpu_custom_call.1} parent=1 // pred_region
      %25 = dma.done [#allocation3], 256
    $region13: #{tpu_custom_call.1} parent=1 // pred_fallthru
      _
    %v26 = vld [vmem:[#allocation2] sm:$0xff]
    %v27 = vld [vmem:[#allocation2 + $0x8] sm:$0xff]
    %vm28 = vcmask 261120
    %v29 = vsel %vm28, %v26, 0.0
    %30 = vadd.xlane.f32.xlu0 %v29
    %v31 = vpop.xlane.xlu0 %30
    %v32 = vsel %vm28, %v27, 0.0
    %33 = vadd.xlane.f32.xlu0 %v32
    %v34 = vpop.xlane.xlu0 %33
    %v35 = vmul.f32 %v26, %v26
    %v36 = vmul.f32 %v27, %v27
    %v37 = vsel %vm28, %v35, 0.0
    %38 = vadd.xlane.f32.xlu0 %v37
    %v39 = vpop.xlane.xlu0 %38
    %v40 = vsel %vm28, %v36, 0.0
    %41 = vadd.xlane.f32.xlu0 %v40
    %v42 = vpop.xlane.xlu0 %41
    %v43 = vmul.f32 %v31, 0.03125
    %v44 = vmul.f32 %v34, 0.03125
    %v45 = vmul.f32 %v39, 0.03125
    %v46 = vmul.f32 %v42, 0.03125
    %v47 = vmul.f32 %v43, %v43
    %v48 = vmul.f32 %v44, %v44
    %v49 = vsub.f32 %v45, %v47
    %v50 = vsub.f32 %v46, %v48
    %v51 = vmax.f32 %v49, 0.0
    %v52 = vmax.f32 %v50, 0.0
    %v53 = vsub.f32 %v26, %v43
    %v54 = vsub.f32 %v27, %v44
    %v55 = vadd.f32 %v51, 1e-05
    %v56 = vadd.f32 %v52, 1e-05
    %v57 = vrsqrt.pop %v55
    %v58 = vrsqrt.pop %v56
    %v59 = vmul.f32 %v53, %v57
    %v60 = vmul.f32 %v54, %v58
    %v61 = vsel %vm28, %v59, 0.0
    %v62 = vrot.slane %v61, 4
    %v63 = vadd.f32 %v61, %v62
    %v64 = vrot.slane %v63, 2
    %v65 = vadd.f32 %v63, %v64
    %v66 = vrot.slane %v65, 1
    %v67 = vadd.f32 %v65, %v66
    %v68 = vsel %vm28, %v60, 0.0
    %v69 = vrot.slane %v68, 4
    %v70 = vadd.f32 %v68, %v69
    %v71 = vrot.slane %v70, 2
    %v72 = vadd.f32 %v70, %v71
    %v73 = vrot.slane %v72, 1
    %v74 = vadd.f32 %v72, %v73
    %v75 = vmul.f32 %v67, 0.125
    %v76 = vmul.f32 %v74, 0.125
    %v77 = vsub.f32 %v59, %v75
    %v78 = vsub.f32 %v60, %v76
    %v79 = vld [vmem:[%s1] sm:$0x1]
    %v81 = vlaneseq
    %v82 = vshrl.u32 %v81, 7
    %v83 = vsub.s32 0, %v82
    %v84 = vrot.slane %v79, %v83
    %v86 = vmul.f32 %v77, %v84
    %v87 = vmul.f32 %v78, %v84
    %88 = vst.msk [vmem:[#allocation5] sm:$0xff] %vm28, %v86
    %89 = vst.msk [vmem:[#allocation5 + $0x8] sm:$0xff] %vm28, %v87
    // Predicated region
    $region14: #{tpu_custom_call.1} parent=1 // pred_check
      _
    $region15: #{tpu_custom_call.1} parent=1 // pred_check_branch
      %91 = sbr.rel (0) target = $region17
    $region16: #{tpu_custom_call.1} parent=1 // pred_region
      %s93 = ssub.s32 256, 256
      %94 = vsyncadd [#allocation4], %s93
      %s95 = sshll.u32 [#allocation5], 4
      %s96 = int_to_ptr.vmem [resolvable:$true] %s95
      %101 = dma.vmem_to_hbm [thread:$0]  %s96, 256, %s2, [#allocation4], 128, 128, 8
    $region17: #{tpu_custom_call.1} parent=1 // pred_fallthru
      _
    // Predicated region
    $region18: #{tpu_custom_call.1} parent=1 // pred_check
      _
    $region19: #{tpu_custom_call.1} parent=1 // pred_check_branch
      %103 = sbr.rel (0) target = $region21
    $region20: #{tpu_custom_call.1} parent=1 // pred_region
      %104 = dma.done [#allocation4], 256
    $region21: #{tpu_custom_call.1} parent=1 // pred_fallthru
      _
    %105 = vsyncpa [#allocation3], 1
    %106 = vsyncpa [#allocation4], 1

</llo_original>
